<compile_context>
chip_gen: v6e
topology: v6e:2x2x1
jax: 0.10.0
libtpu: 0.0.40
codegen_flags: <defaults>
</compile_context>

<pallas_src>
import jax
import jax.numpy as jnp
from jax.experimental import pallas as pl
from jax.experimental.pallas import tpu as pltpu

BN_EPS = 1e-5
LANE = 128      # vreg lane width: pad weight/bias last dims to this for dense MXU/store
SUBLANE = 8     # vreg sublane count: pad the packed vector-param buffer rows to this


def _round_up(n, m):
    return ((n + m - 1) // m) * m


# ---------------------------------------------------------------------------
# Kernel: fused BN(scale/shift) -> [dropout] -> 3x(Linear+ReLU), one VMEM block.
# ---------------------------------------------------------------------------
def subnet_kernel(x_ref, vec_ref, w_ref, out_ref):
    # x: [B, in_size] f32 (unpadded).  Elementwise/BN math stays f32; only MXU
    # operands are cast to the (packed) weight dtype.
    x = x_ref[...]
    batch, in_size = x.shape
    mm_dtype = w_ref.dtype

    # Packed parameter rows: 0 gamma, 1 beta, 2 b1, 3 b2, 4 b3 (zero-padded to P lanes).
    gamma = vec_ref[0:1, :in_size]
    beta = vec_ref[1:2, :in_size]
    b1 = vec_ref[2:3, :]
    b2 = vec_ref[3:4, :]
    b3 = vec_ref[4:5, :]

    # --- BatchNorm1d (training-mode batch stats, biased variance) -------------
    # One pass over x: accumulate sum and sum-of-squares together, then fold the
    # whole normalization into a single scale/shift pair: normed = x*scale + shift.
    inv_n = 1.0 / batch
    mean = jnp.sum(x, axis=0, keepdims=True) * inv_n
    ex2 = jnp.sum(x * x, axis=0, keepdims=True) * inv_n
    var = jnp.maximum(ex2 - mean * mean, 0.0)
    inv_std = jax.lax.rsqrt(var + BN_EPS)
    scale = gamma * inv_std
    shift = beta - mean * scale
    normed = x * scale + shift

    # --- Dropout ---------------------------------------------------------------
    # TODO(synk): training-mode dropout needs a pltpu.prng_seed/prng_random_bits
    # mask + 1/(1-p) scaling; this kernel implements eval-mode (identity) dropout.
    dropped = normed

    # --- three Linear + ReLU layers on the MXU (f32 accumulation) --------------
    # w_ref: [3, P, P]; only the first in_size rows of w_ref[0] are real w1 rows.
    w1 = w_ref[0][:in_size, :]
    y1 = jnp.dot(dropped.astype(mm_dtype), w1,
                 preferred_element_type=jnp.float32)
    y1 = jnp.maximum(y1 + b1, 0.0)

    y2 = jnp.dot(y1.astype(mm_dtype), w_ref[1],
                 preferred_element_type=jnp.float32)
    y2 = jnp.maximum(y2 + b2, 0.0)

    y3 = jnp.dot(y2.astype(mm_dtype), w_ref[2],
                 preferred_element_type=jnp.float32)
    y3 = jnp.maximum(y3 + b3, 0.0)

    # Full-lane (P = 128 wide) unmasked store; padded lanes are exactly zero.
    out_ref[...] = y3.astype(out_ref.dtype)


# ---------------------------------------------------------------------------
# One-time (init-time) parameter packing -> 2 lane-dense device operands.
# ---------------------------------------------------------------------------
def pack_params(params, matmul_dtype=jnp.bfloat16):
    """Collapse 9 small parameter arrays into (vec [8,P] f32, w_stack [3,P,P])."""
    in_size, hidden = params["w1"].shape
    in_pad = _round_up(in_size, LANE)
    h_pad = _round_up(hidden, LANE)
    P = max(in_pad, h_pad)

    def pad_row(v):
        v = v.reshape(1, -1).astype(jnp.float32)
        return jnp.pad(v, ((0, 0), (0, P - v.shape[1])))

    vec = jnp.concatenate(
        [pad_row(params["gamma"]), pad_row(params["beta"]),
         pad_row(params["b1"]), pad_row(params["b2"]), pad_row(params["b3"])],
        axis=0)
    vec = jnp.pad(vec, ((0, SUBLANE - vec.shape[0]), (0, 0)))          # [8, P]

    def pad_w(w):
        return jnp.pad(w.astype(jnp.float32),
                       ((0, P - w.shape[0]), (0, P - w.shape[1])))

    w_stack = jnp.stack([pad_w(params["w1"]), pad_w(params["w2"]),
                         pad_w(params["w3"])]).astype(matmul_dtype)    # [3, P, P]
    return vec, w_stack


# ---------------------------------------------------------------------------
# Jitted forward: only the kernel launch, no per-call packing / pad / slice.
# ---------------------------------------------------------------------------
@jax.jit
def subnet_forward(x, vec, w_stack):
    """x: [batch, in_size] f32 (unpadded).  Returns a lane-dense padded
    [batch, P] slab; real outputs live in columns [:hidden], padded columns are 0."""
    batch = x.shape[0]
    P = w_stack.shape[-1]
    vmem = lambda: pl.BlockSpec(memory_space=pltpu.MemorySpace.VMEM)
    return pl.pallas_call(
        subnet_kernel,
        out_shape=jax.ShapeDtypeStruct((batch, P), jnp.float32),
        in_specs=[vmem(), vmem(), vmem()],
        out_specs=vmem(),
    )(x.astype(jnp.float32), vec, w_stack)


# ---------------------------------------------------------------------------
# Deterministic synthetic parameters matching the nn.Module shapes.
# PyTorch Linear stores weight as [out, in]; we store the transpose [in, out]
# so the kernel computes x @ W directly.
# ---------------------------------------------------------------------------
def init_params(key, in_size, hidden_size):
    k1, k2, k3, k4, k5, k6 = jax.random.split(key, 6)

    def lin(kw, fan_in, fan_out):
        std = (2.0 / (fan_in + fan_out)) ** 0.5        # xavier-normal-ish
        return jax.random.normal(kw, (fan_in, fan_out), jnp.float32) * std

    return {
        # BatchNorm1d affine params (default init: gamma=1, beta=0)
        "gamma": jnp.ones((1, in_size), jnp.float32),
        "beta": jnp.zeros((1, in_size), jnp.float32),
        # linear_1: in_size -> hidden
        "w1": lin(k1, in_size, hidden_size),
        "b1": jax.random.normal(k2, (1, hidden_size), jnp.float32) * 0.01,
        # linear_2: hidden -> hidden
        "w2": lin(k3, hidden_size, hidden_size),
        "b2": jax.random.normal(k4, (1, hidden_size), jnp.float32) * 0.01,
        # linear_3: hidden -> hidden
        "w3": lin(k5, hidden_size, hidden_size),
        "b3": jax.random.normal(k6, (1, hidden_size), jnp.float32) * 0.01,
    }


def subnet_reference(x, params):
    """Pure-JAX reference (same semantics) for a sanity check."""
    mean = jnp.mean(x, axis=0, keepdims=True)
    var = jnp.mean((x - mean) ** 2, axis=0, keepdims=True)
    normed = (x - mean) / jnp.sqrt(var + BN_EPS) * params["gamma"] + params["beta"]
    y = jax.nn.relu(normed @ params["w1"] + params["b1"])
    y = jax.nn.relu(y @ params["w2"] + params["b2"])
    y = jax.nn.relu(y @ params["w3"] + params["b3"])
    return y


if __name__ == "__main__":
    batch, in_size, hidden_size = 8, 16, 32
    dropout = 0.2  # unused in eval-mode forward

    key = jax.random.PRNGKey(0)
    kx, kp = jax.random.split(key)
    x = jax.random.normal(kx, (batch, in_size), jnp.float32)
    params = init_params(kp, in_size, hidden_size)

    ref = jax.block_until_ready(subnet_reference(x, params))

    # --- default path: bf16 MXU operands, f32 accumulation / elementwise ------
    vec_bf16, w_bf16 = pack_params(params, matmul_dtype=jnp.bfloat16)  # once, at init
    out_bf16 = jax.block_until_ready(subnet_forward(x, vec_bf16, w_bf16))
    assert out_bf16.shape == (batch, LANE)
    assert jnp.allclose(out_bf16[:, :hidden_size], ref, atol=1e-1, rtol=1e-1)

    # --- f32 MXU path (near-bit-exact vs. the reference) ----------------------
    vec_f32, w_f32 = pack_params(params, matmul_dtype=jnp.float32)     # once, at init
    out_f32 = jax.block_until_ready(subnet_forward(x, vec_f32, w_f32))
    assert out_f32.shape == (batch, LANE)
    assert jnp.allclose(out_f32[:, :hidden_size], ref, atol=1e-3, rtol=1e-3)
    # Padded output lanes are exactly zero (zero-padded weights & biases, relu).
    assert jnp.all(out_f32[:, hidden_size:] == 0.0)

    print("KERNEL_OK")
</pallas_src>

<mosaic_0001>
module attributes {stable_mosaic.version = 11 : i64} {
  func.func @subnet_kernel(%arg0: memref<8x16xf32, #tpu.memory_space<vmem>>, %arg1: memref<8x128xf32, #tpu.memory_space<vmem>>, %arg2: memref<3x128x128xbf16, #tpu.memory_space<vmem>>, %arg3: memref<8x128xf32, #tpu.memory_space<vmem>>) attributes {dimension_semantics = [], scalar_prefetch = 0 : i64, scratch_operands = 0 : i64, tpu.core_type = #tpu.core_type<tc>} {
    %c0 = arith.constant 0 : index
    %c0_0 = arith.constant 0 : index
    %0 = vector.load %arg0[%c0, %c0_0] : memref<8x16xf32, #tpu.memory_space<vmem>>, vector<8x16xf32>
    %c0_1 = arith.constant 0 : index
    %c0_2 = arith.constant 0 : index
    %1 = vector.load %arg1[%c0_1, %c0_2] : memref<8x128xf32, #tpu.memory_space<vmem>>, vector<1x16xf32>
    %c1 = arith.constant 1 : index
    %c0_3 = arith.constant 0 : index
    %2 = vector.load %arg1[%c1, %c0_3] : memref<8x128xf32, #tpu.memory_space<vmem>>, vector<1x16xf32>
    %c2 = arith.constant 2 : index
    %c0_4 = arith.constant 0 : index
    %3 = vector.load %arg1[%c2, %c0_4] : memref<8x128xf32, #tpu.memory_space<vmem>>, vector<1x128xf32>
    %c3 = arith.constant 3 : index
    %c0_5 = arith.constant 0 : index
    %4 = vector.load %arg1[%c3, %c0_5] : memref<8x128xf32, #tpu.memory_space<vmem>>, vector<1x128xf32>
    %c4 = arith.constant 4 : index
    %c0_6 = arith.constant 0 : index
    %5 = vector.load %arg1[%c4, %c0_6] : memref<8x128xf32, #tpu.memory_space<vmem>>, vector<1x128xf32>
    %cst = arith.constant dense<0.000000e+00> : vector<16xf32>
    %6 = vector.multi_reduction <add>, %0, %cst [0] : vector<8x16xf32> to vector<16xf32>
    %7 = vector.shape_cast %6 : vector<16xf32> to vector<1x16xf32>
    %cst_7 = arith.constant 1.250000e-01 : f32
    %8 = vector.broadcast %cst_7 : f32 to vector<1x16xf32>
    %9 = arith.mulf %7, %8 : vector<1x16xf32>
    %10 = arith.mulf %0, %0 : vector<8x16xf32>
    %cst_8 = arith.constant dense<0.000000e+00> : vector<16xf32>
    %11 = vector.multi_reduction <add>, %10, %cst_8 [0] : vector<8x16xf32> to vector<16xf32>
    %12 = vector.shape_cast %11 : vector<16xf32> to vector<1x16xf32>
    %cst_9 = arith.constant 1.250000e-01 : f32
    %13 = vector.broadcast %cst_9 : f32 to vector<1x16xf32>
    %14 = arith.mulf %12, %13 : vector<1x16xf32>
    %15 = arith.mulf %9, %9 : vector<1x16xf32>
    %16 = arith.subf %14, %15 : vector<1x16xf32>
    %cst_10 = arith.constant 0.000000e+00 : f32
    %17 = vector.broadcast %cst_10 : f32 to vector<1x16xf32>
    %18 = arith.maximumf %16, %17 : vector<1x16xf32>
    %cst_11 = arith.constant 9.99999974E-6 : f32
    %19 = vector.broadcast %cst_11 : f32 to vector<1x16xf32>
    %20 = arith.addf %18, %19 : vector<1x16xf32>
    %21 = math.rsqrt %20 : vector<1x16xf32>
    %22 = arith.mulf %1, %21 : vector<1x16xf32>
    %23 = arith.mulf %9, %22 : vector<1x16xf32>
    %24 = arith.subf %2, %23 : vector<1x16xf32>
    %25 = vector.broadcast %22 : vector<1x16xf32> to vector<8x16xf32>
    %26 = arith.mulf %0, %25 : vector<8x16xf32>
    %27 = vector.broadcast %24 : vector<1x16xf32> to vector<8x16xf32>
    %28 = arith.addf %26, %27 : vector<8x16xf32>
    %c0_12 = arith.constant 0 : index
    %c0_13 = arith.constant 0 : index
    %c0_14 = arith.constant 0 : index
    %29 = vector.load %arg2[%c0_12, %c0_13, %c0_14] : memref<3x128x128xbf16, #tpu.memory_space<vmem>>, vector<1x128x128xbf16>
    %30 = vector.shape_cast %29 : vector<1x128x128xbf16> to vector<128x128xbf16>
    %31 = vector.extract_strided_slice %30 {offsets = [0, 0], sizes = [16, 128], strides = [1, 1]} : vector<128x128xbf16> to vector<16x128xbf16>
    %32 = arith.truncf %28 : vector<8x16xf32> to vector<8x16xbf16>
    %cst_15 = arith.constant dense<0.000000e+00> : vector<8x128xf32>
    %33 = tpu.matmul %32, %31, %cst_15 {dimension_numbers = #tpu.dot_dimension_numbers<[1], [0], [0], [1], [0, 0, 1, 1], [], []>} : vector<8x16xbf16>, vector<16x128xbf16>, vector<8x128xf32> -> vector<8x128xf32>
    %34 = vector.broadcast %3 : vector<1x128xf32> to vector<8x128xf32>
    %35 = arith.addf %33, %34 : vector<8x128xf32>
    %cst_16 = arith.constant 0.000000e+00 : f32
    %36 = vector.broadcast %cst_16 : f32 to vector<8x128xf32>
    %37 = arith.maximumf %35, %36 : vector<8x128xf32>
    %38 = arith.truncf %37 : vector<8x128xf32> to vector<8x128xbf16>
    %c1_17 = arith.constant 1 : index
    %c0_18 = arith.constant 0 : index
    %c0_19 = arith.constant 0 : index
    %39 = vector.load %arg2[%c1_17, %c0_18, %c0_19] : memref<3x128x128xbf16, #tpu.memory_space<vmem>>, vector<1x128x128xbf16>
    %40 = vector.shape_cast %39 : vector<1x128x128xbf16> to vector<128x128xbf16>
    %cst_20 = arith.constant dense<0.000000e+00> : vector<8x128xf32>
    %41 = tpu.matmul %38, %40, %cst_20 {dimension_numbers = #tpu.dot_dimension_numbers<[1], [0], [0], [1], [0, 0, 1, 1], [], []>} : vector<8x128xbf16>, vector<128x128xbf16>, vector<8x128xf32> -> vector<8x128xf32>
    %42 = vector.broadcast %4 : vector<1x128xf32> to vector<8x128xf32>
    %43 = arith.addf %41, %42 : vector<8x128xf32>
    %cst_21 = arith.constant 0.000000e+00 : f32
    %44 = vector.broadcast %cst_21 : f32 to vector<8x128xf32>
    %45 = arith.maximumf %43, %44 : vector<8x128xf32>
    %46 = arith.truncf %45 : vector<8x128xf32> to vector<8x128xbf16>
    %c2_22 = arith.constant 2 : index
    %c0_23 = arith.constant 0 : index
    %c0_24 = arith.constant 0 : index
    %47 = vector.load %arg2[%c2_22, %c0_23, %c0_24] : memref<3x128x128xbf16, #tpu.memory_space<vmem>>, vector<1x128x128xbf16>
    %48 = vector.shape_cast %47 : vector<1x128x128xbf16> to vector<128x128xbf16>
    %cst_25 = arith.constant dense<0.000000e+00> : vector<8x128xf32>
    %49 = tpu.matmul %46, %48, %cst_25 {dimension_numbers = #tpu.dot_dimension_numbers<[1], [0], [0], [1], [0, 0, 1, 1], [], []>} : vector<8x128xbf16>, vector<128x128xbf16>, vector<8x128xf32> -> vector<8x128xf32>
    %50 = vector.broadcast %5 : vector<1x128xf32> to vector<8x128xf32>
    %51 = arith.addf %49, %50 : vector<8x128xf32>
    %cst_26 = arith.constant 0.000000e+00 : f32
    %52 = vector.broadcast %cst_26 : f32 to vector<8x128xf32>
    %53 = arith.maximumf %51, %52 : vector<8x128xf32>
    %c0_27 = arith.constant 0 : index
    %c0_28 = arith.constant 0 : index
    %54 = vector.load %arg3[%c0_27, %c0_28] : memref<8x128xf32, #tpu.memory_space<vmem>>, vector<8x128xf32>
    tpu.vector_store %arg3[%c0_27, %c0_28], %53 {strides = array<i32>} : memref<8x128xf32, #tpu.memory_space<vmem>>, vector<8x128xf32>,
    return
  }
}

</mosaic_0001>

<llo_original>
// kernel: subnet_forward.1
$region0: #{subnet_forward.1}
  #allocation0 [shape = 'u32[]', space=smem, size = 0x4, offset = 0x4, fixed_abs, tag = 'smem constant byte address 0x4 - core index']
  #allocation1 [shape = 'u32[144,128]{1,0:T(1,128)}', space=vmem, size = 0x12000, scoped, tag = 'internal scratch']
  %s0 = inlined_call_operand.hbm [shape: f32[8,16], index: 0, kind: input, shape index: {}]
  %s1 = inlined_call_operand.hbm [shape: f32[8,128], index: 1, kind: input, shape index: {}]
  %s2 = inlined_call_operand.hbm [shape: bf16[3,128,128], index: 2, kind: input, shape index: {}]
  %s3 = inlined_call_operand.hbm [shape: f32[8,128], index: 3, kind: output, shape index: {}]
  %s4 = sld [smem:[#allocation0]]
  $region34: #{subnet_forward.1} parent=0
    _
  %s6 = ssub.s32 1, %s4
  %s7 = scalar_select 0, %s6, %s4
  $region1: #{subnet_forward.1} parent=0
    #allocation2 [shape = 'u8[4096]{0}', space=vmem, size = 0x1000, scoped, tag = 'input window, operand 0, single buffered']
    #allocation3 [shape = 's32[1]{0}', space=sflag, size = 0x4, scoped, tag = 'scoped memory for subnet_forward.1']
    #allocation4 [shape = 's32[1]{0}', space=sflag, size = 0x4, scoped, tag = 'scoped memory for subnet_forward.1']
    #allocation5 [shape = 'u8[4096]{0}', space=vmem, size = 0x1000, scoped, tag = 'input window, operand 1, single buffered']
    #allocation6 [shape = 's32[1]{0}', space=sflag, size = 0x4, scoped, tag = 'scoped memory for subnet_forward.1']
    #allocation7 [shape = 'u8[98304]{0}', space=vmem, size = 0x18000, scoped, tag = 'input window, operand 2, single buffered']
    #allocation8 [shape = 'u8[4096]{0}', space=vmem, size = 0x1000, scoped, tag = 'output window, operand 0, single buffered']
    %8 = vsyncpa [#allocation3], 0
    %9 = vsyncpa [#allocation6], 0
    %10 = vsyncpa [#allocation4], 0
    // Predicated region
    $region2: #{subnet_forward.1} parent=1 // pred_check
      _
    $region3: #{subnet_forward.1} parent=1 // pred_check_branch
      %12 = sbr.rel (0) target = $region5
    $region4: #{subnet_forward.1} parent=1 // pred_region
      %s14 = ssub.s32 128, 128
      %15 = vsyncadd [#allocation3], %s14
      %s17 = sshll.u32 [#allocation2], 4
      %s18 = int_to_ptr.vmem [resolvable:$true] %s17
      %20 = dma.hbm_to_vmem [thread:$0]  %s0, 128, %s18, [#allocation3]
    $region5: #{subnet_forward.1} parent=1 // pred_fallthru
      _
    // Predicated region
    $region6: #{subnet_forward.1} parent=1 // pred_check
      _
    $region7: #{subnet_forward.1} parent=1 // pred_check_branch
      %22 = sbr.rel (0) target = $region9
    $region8: #{subnet_forward.1} parent=1 // pred_region
      %s24 = ssub.s32 128, 128
      %25 = vsyncadd [#allocation6], %s24
      %s27 = sshll.u32 [#allocation5], 4
      %s28 = int_to_ptr.vmem [resolvable:$true] %s27
      %30 = dma.hbm_to_vmem [thread:$0]  %s1, 128, %s28, [#allocation6]
    $region9: #{subnet_forward.1} parent=1 // pred_fallthru
      _
    // Predicated region
    $region10: #{subnet_forward.1} parent=1 // pred_check
      _
    $region11: #{subnet_forward.1} parent=1 // pred_check_branch
      %32 = sbr.rel (0) target = $region13
    $region12: #{subnet_forward.1} parent=1 // pred_region
      %s34 = ssub.s32 3072, 3072
      %35 = vsyncadd [#allocation6], %s34
      %s36 = sshll.u32 [#allocation7], 4
      %s37 = int_to_ptr.vmem [resolvable:$true] %s36
      %42 = dma.hbm_to_vmem [thread:$0]  %s2, 3072, %s37, [#allocation6], 64, 64, 4
    $region13: #{subnet_forward.1} parent=1 // pred_fallthru
      _
    // Predicated region
    $region14: #{subnet_forward.1} parent=1 // pred_check
      _
    $region15: #{subnet_forward.1} parent=1 // pred_check_branch
      %44 = sbr.rel (0) target = $region17
    $region16: #{subnet_forward.1} parent=1 // pred_region
      %45 = dma.done [#allocation3], 128
    $region17: #{subnet_forward.1} parent=1 // pred_fallthru
      _
    // Predicated region
    $region18: #{subnet_forward.1} parent=1 // pred_check
      _
    $region19: #{subnet_forward.1} parent=1 // pred_check_branch
      %47 = sbr.rel (0) target = $region21
    $region20: #{subnet_forward.1} parent=1 // pred_region
      %48 = dma.done [#allocation6], 128
    $region21: #{subnet_forward.1} parent=1 // pred_fallthru
      _
    // Predicated region
    $region22: #{subnet_forward.1} parent=1 // pred_check
      _
    $region23: #{subnet_forward.1} parent=1 // pred_check_branch
      %50 = sbr.rel (0) target = $region25
    $region24: #{subnet_forward.1} parent=1 // pred_region
      %51 = dma.done [#allocation6], 3072
    $region25: #{subnet_forward.1} parent=1 // pred_fallthru
      _
    %v53 = vld [vmem:[#allocation2] sm:$0xff]
    %v54 = vld [vmem:[#allocation5] sm:$0x1]
    %v55 = vld [vmem:[#allocation5 + $0x1] sm:$0x1]
    %v56 = vld [vmem:[#allocation5 + $0x2] sm:$0x1]
    %v57 = vld [vmem:[#allocation5 + $0x3] sm:$0x1]
    %v58 = vld [vmem:[#allocation5 + $0x4] sm:$0x1]
    %vm59 = vcmask 130048
    %v60 = vsel %vm59, %v53, 0.0
    %v61 = vrot.slane %v60, 4
    %v62 = vadd.f32 %v60, %v61
    %v63 = vrot.slane %v62, 2
    %v64 = vadd.f32 %v62, %v63
    %v65 = vrot.slane %v64, 1
    %v66 = vadd.f32 %v64, %v65
    %v67 = vmul.f32 %v66, 0.125
    %v68 = vmul.f32 %v53, %v53
    %v69 = vsel %vm59, %v68, 0.0
    %v70 = vrot.slane %v69, 4
    %v71 = vadd.f32 %v69, %v70
    %v72 = vrot.slane %v71, 2
    %v73 = vadd.f32 %v71, %v72
    %v74 = vrot.slane %v73, 1
    %v75 = vadd.f32 %v73, %v74
    %v76 = vmul.f32 %v75, 0.125
    %v77 = vmul.f32 %v67, %v67
    %v78 = vsub.f32 %v76, %v77
    %v79 = vmax.f32 %v78, 0.0
    %v80 = vadd.f32 %v79, 1e-05
    %v81 = vrsqrt.pop %v80
    %v82 = vmul.f32 %v54, %v81
    %v83 = vmul.f32 %v67, %v82
    %v84 = vsub.f32 %v55, %v83
    %v85 = vlaneseq
    %v86 = vshrl.u32 %v85, 7
    %v87 = vsub.s32 0, %v86
    %v88 = vrot.slane %v82, %v87
    %v89 = vmul.f32 %v53, %v88
    %v90 = vlaneseq
    %v91 = vshrl.u32 %v90, 7
    %v92 = vsub.s32 0, %v91
    %v93 = vrot.slane %v84, %v92
    %v94 = vadd.f32 %v89, %v93
    %v95 = vld [vmem:[#allocation7] sm:$0xf]
    %v96 = vld [vmem:[#allocation7 + $0x4] sm:$0xf]
    %v97 = vpack.c.bf16 %v94, %v94
    %v98 = vlaneseq
    %v99 = vshrl.u32 %v98, 7
    %v100 = vsub.s32 0, %v99
    %v101 = vrot.slane %v56, %v100
    %v104 = vunpack.c.l.b16 %v95
    %v105 = vunpack.c.l.b16 %v96
    %v106 = vpack.c.b16 %v105, %v104
    %v109 = vsel %vm59, %v97, 0
    %111 = vmatprep.subr.bf16.mxu0 0
    %112 = vmatpush1.bf16.msra.mxu0 0
    %113 = vmatprep.subr.bf16.mxu0 0
    %114 = vmatpush1.bf16.msra.mxu0 0
    %115 = vmatprep.subr.bf16.mxu0 0
    %116 = vmatpush1.bf16.msra.mxu0 0
    %117 = vmatprep.subr.bf16.mxu0 0
    %118 = vmatpush1.bf16.msra.mxu0 0
    %119 = vmatprep.subr.bf16.mxu0 0
    %120 = vmatpush1.bf16.msra.mxu0 0
    %121 = vmatprep.subr.bf16.mxu0 0
    %122 = vmatpush1.bf16.msra.mxu0 0
    %123 = vmatprep.subr.bf16.mxu0 0
    %124 = vmatpush1.bf16.msra.mxu0 0
    %125 = vmatprep.subr.bf16.mxu0 0
    %126 = vmatpush1.bf16.msra.mxu0 %v106
    %127 = vmatprep.subr.bf16.mxu0 0
    %128 = vmatpush2.bf16.msra.mxu0 0
    %129 = vmatprep.subr.bf16.mxu0 0
    %130 = vmatpush2.bf16.msra.mxu0 0
    %131 = vmatprep.subr.bf16.mxu0 0
    %132 = vmatpush2.bf16.msra.mxu0 0
    %133 = vmatprep.subr.bf16.mxu0 0
    %134 = vmatpush2.bf16.msra.mxu0 0
    %135 = vmatprep.subr.bf16.mxu0 0
    %136 = vmatpush2.bf16.msra.mxu0 0
    %137 = vmatprep.subr.bf16.mxu0 0
    %138 = vmatpush2.bf16.msra.mxu0 0
    %139 = vmatprep.subr.bf16.mxu0 0
    %140 = vmatpush2.bf16.msra.mxu0 0
    %141 = vmatprep.subr.bf16.mxu0 0
    %142 = vmatpush2.bf16.msra.mxu0 0
    %143 = vmatprep.mubr.bf16.mxu0 0
    %144 = vmatmul.mubr.bf16.gmra.mxu0 %v109
    %v145 = vpop.f32.mrf.mxu0
    %v146 = vadd.f32 %v101, %v145
    %v147 = vpop.f32.mrf.mxu0
    %v148 = vpop.f32.mrf.mxu0
    %v149 = vpop.f32.mrf.mxu0
    %150 = vdwg.mxu0
    %v151 = vmax.f32 %v146, 0.0
    %v152 = vpack.c.bf16 %v151, %v151
    %s153 = scalar_lea.vmem [#allocation7], 64
    %v154 = vld [vmem:[%s153] sm:$0xf]
    %v155 = vld [vmem:[%s153 + $0x4] sm:$0xf]
    %v156 = vld [vmem:[%s153 + $0x8] sm:$0xf]
    %v157 = vld [vmem:[%s153 + $0xc] sm:$0xf]
    %v158 = vld [vmem:[%s153 + $0x10] sm:$0xf]
    %v159 = vld [vmem:[%s153 + $0x14] sm:$0xf]
    %v160 = vld [vmem:[%s153 + $0x18] sm:$0xf]
    %v161 = vld [vmem:[%s153 + $0x1c] sm:$0xf]
    %v162 = vld [vmem:[%s153 + $0x20] sm:$0xf]
    %v163 = vld [vmem:[%s153 + $0x24] sm:$0xf]
    %v164 = vld [vmem:[%s153 + $0x28] sm:$0xf]
    %v165 = vld [vmem:[%s153 + $0x2c] sm:$0xf]
    %v166 = vld [vmem:[%s153 + $0x30] sm:$0xf]
    %v167 = vld [vmem:[%s153 + $0x34] sm:$0xf]
    %v168 = vld [vmem:[%s153 + $0x38] sm:$0xf]
    %v169 = vld [vmem:[%s153 + $0x3c] sm:$0xf]
    %v170 = vlaneseq
    %v171 = vshrl.u32 %v170, 7
    %v172 = vsub.s32 0, %v171
    %v173 = vrot.slane %v57, %v172
    %v190 = vunpack.c.l.b16 %v154
    %v191 = vunpack.c.l.b16 %v155
    %v192 = vunpack.c.l.b16 %v156
    %v193 = vunpack.c.l.b16 %v157
    %v194 = vunpack.c.l.b16 %v158
    %v195 = vunpack.c.l.b16 %v159
    %v196 = vunpack.c.l.b16 %v160
    %v197 = vunpack.c.l.b16 %v161
    %v198 = vunpack.c.l.b16 %v162
    %v199 = vunpack.c.l.b16 %v163
    %v200 = vunpack.c.l.b16 %v164
    %v201 = vunpack.c.l.b16 %v165
    %v202 = vunpack.c.l.b16 %v166
    %v203 = vunpack.c.l.b16 %v167
    %v204 = vunpack.c.l.b16 %v168
    %v205 = vunpack.c.l.b16 %v169
    %v206 = vpack.c.b16 %v191, %v190
    %v207 = vpack.c.b16 %v193, %v192
    %v208 = vpack.c.b16 %v195, %v194
    %v209 = vpack.c.b16 %v197, %v196
    %v210 = vpack.c.b16 %v199, %v198
    %v211 = vpack.c.b16 %v201, %v200
    %v212 = vpack.c.b16 %v203, %v202
    %v213 = vpack.c.b16 %v205, %v204
    %222 = vmatprep.subr.bf16.mxu0 0
    %223 = vmatpush1.bf16.msra.mxu0 %v213
    %224 = vmatprep.subr.bf16.mxu0 0
    %225 = vmatpush1.bf16.msra.mxu0 %v212
    %226 = vmatprep.subr.bf16.mxu0 0
    %227 = vmatpush1.bf16.msra.mxu0 %v211
    %228 = vmatprep.subr.bf16.mxu0 0
    %229 = vmatpush1.bf16.msra.mxu0 %v210
    %230 = vmatprep.subr.bf16.mxu0 0
    %231 = vmatpush1.bf16.msra.mxu0 %v209
    %232 = vmatprep.subr.bf16.mxu0 0
    %233 = vmatpush1.bf16.msra.mxu0 %v208
    %234 = vmatprep.subr.bf16.mxu0 0
    %235 = vmatpush1.bf16.msra.mxu0 %v207
    %236 = vmatprep.subr.bf16.mxu0 0
    %237 = vmatpush1.bf16.msra.mxu0 %v206
    %238 = vmatprep.subr.bf16.mxu0 0
    %239 = vmatpush2.bf16.msra.mxu0 0
    %240 = vmatprep.subr.bf16.mxu0 0
    %241 = vmatpush2.bf16.msra.mxu0 0
    %242 = vmatprep.subr.bf16.mxu0 0
    %243 = vmatpush2.bf16.msra.mxu0 0
    %244 = vmatprep.subr.bf16.mxu0 0
    %245 = vmatpush2.bf16.msra.mxu0 0
    %246 = vmatprep.subr.bf16.mxu0 0
    %247 = vmatpush2.bf16.msra.mxu0 0
    %248 = vmatprep.subr.bf16.mxu0 0
    %249 = vmatpush2.bf16.msra.mxu0 0
    %250 = vmatprep.subr.bf16.mxu0 0
    %251 = vmatpush2.bf16.msra.mxu0 0
    %252 = vmatprep.subr.bf16.mxu0 0
    %253 = vmatpush2.bf16.msra.mxu0 0
    %254 = vmatprep.mubr.bf16.mxu0 0
    %255 = vmatmul.mubr.bf16.gmra.mxu0 %v152
    %v256 = vpop.f32.mrf.mxu0
    %v257 = vadd.f32 %v173, %v256
    %v258 = vpop.f32.mrf.mxu0
    %v259 = vpop.f32.mrf.mxu0
    %v260 = vpop.f32.mrf.mxu0
    %261 = vdwg.mxu0
    %v262 = vmax.f32 %v257, 0.0
    %v263 = vpack.c.bf16 %v262, %v262
    %s264 = scalar_lea.vmem [#allocation7], 128
    %v265 = vld [vmem:[%s264] sm:$0xf]
    %v266 = vld [vmem:[%s264 + $0x4] sm:$0xf]
    %v267 = vld [vmem:[%s264 + $0x8] sm:$0xf]
    %v268 = vld [vmem:[%s264 + $0xc] sm:$0xf]
    %v269 = vld [vmem:[%s264 + $0x10] sm:$0xf]
    %v270 = vld [vmem:[%s264 + $0x14] sm:$0xf]
    %v271 = vld [vmem:[%s264 + $0x18] sm:$0xf]
    %v272 = vld [vmem:[%s264 + $0x1c] sm:$0xf]
    %v273 = vld [vmem:[%s264 + $0x20] sm:$0xf]
    %v274 = vld [vmem:[%s264 + $0x24] sm:$0xf]
    %v275 = vld [vmem:[%s264 + $0x28] sm:$0xf]
    %v276 = vld [vmem:[%s264 + $0x2c] sm:$0xf]
    %v277 = vld [vmem:[%s264 + $0x30] sm:$0xf]
    %v278 = vld [vmem:[%s264 + $0x34] sm:$0xf]
    %v279 = vld [vmem:[%s264 + $0x38] sm:$0xf]
    %v280 = vld [vmem:[%s264 + $0x3c] sm:$0xf]
    %v281 = vlaneseq
    %v282 = vshrl.u32 %v281, 7
    %v283 = vsub.s32 0, %v282
    %v284 = vrot.slane %v58, %v283
    %v301 = vunpack.c.l.b16 %v265
    %v302 = vunpack.c.l.b16 %v266
    %v303 = vunpack.c.l.b16 %v267
    %v304 = vunpack.c.l.b16 %v268
    %v305 = vunpack.c.l.b16 %v269
    %v306 = vunpack.c.l.b16 %v270
    %v307 = vunpack.c.l.b16 %v271
    %v308 = vunpack.c.l.b16 %v272
    %v309 = vunpack.c.l.b16 %v273
    %v310 = vunpack.c.l.b16 %v274
    %v311 = vunpack.c.l.b16 %v275
    %v312 = vunpack.c.l.b16 %v276
    %v313 = vunpack.c.l.b16 %v277
    %v314 = vunpack.c.l.b16 %v278
    %v315 = vunpack.c.l.b16 %v279
    %v316 = vunpack.c.l.b16 %v280
    %v317 = vpack.c.b16 %v302, %v301
    %v318 = vpack.c.b16 %v304, %v303
    %v319 = vpack.c.b16 %v306, %v305
    %v320 = vpack.c.b16 %v308, %v307
    %v321 = vpack.c.b16 %v310, %v309
    %v322 = vpack.c.b16 %v312, %v311
    %v323 = vpack.c.b16 %v314, %v313
    %v324 = vpack.c.b16 %v316, %v315
    %333 = vmatprep.subr.bf16.mxu0 0
    %334 = vmatpush1.bf16.msra.mxu0 %v324
    %335 = vmatprep.subr.bf16.mxu0 0
    %336 = vmatpush1.bf16.msra.mxu0 %v323
    %337 = vmatprep.subr.bf16.mxu0 0
    %338 = vmatpush1.bf16.msra.mxu0 %v322
    %339 = vmatprep.subr.bf16.mxu0 0
    %340 = vmatpush1.bf16.msra.mxu0 %v321
    %341 = vmatprep.subr.bf16.mxu0 0
    %342 = vmatpush1.bf16.msra.mxu0 %v320
    %343 = vmatprep.subr.bf16.mxu0 0
    %344 = vmatpush1.bf16.msra.mxu0 %v319
    %345 = vmatprep.subr.bf16.mxu0 0
    %346 = vmatpush1.bf16.msra.mxu0 %v318
    %347 = vmatprep.subr.bf16.mxu0 0
    %348 = vmatpush1.bf16.msra.mxu0 %v317
    %349 = vmatprep.subr.bf16.mxu0 0
    %350 = vmatpush2.bf16.msra.mxu0 0
    %351 = vmatprep.subr.bf16.mxu0 0
    %352 = vmatpush2.bf16.msra.mxu0 0
    %353 = vmatprep.subr.bf16.mxu0 0
    %354 = vmatpush2.bf16.msra.mxu0 0
    %355 = vmatprep.subr.bf16.mxu0 0
    %356 = vmatpush2.bf16.msra.mxu0 0
    %357 = vmatprep.subr.bf16.mxu0 0
    %358 = vmatpush2.bf16.msra.mxu0 0
    %359 = vmatprep.subr.bf16.mxu0 0
    %360 = vmatpush2.bf16.msra.mxu0 0
    %361 = vmatprep.subr.bf16.mxu0 0
    %362 = vmatpush2.bf16.msra.mxu0 0
    %363 = vmatprep.subr.bf16.mxu0 0
    %364 = vmatpush2.bf16.msra.mxu0 0
    %365 = vmatprep.mubr.bf16.mxu0 0
    %366 = vmatmul.mubr.bf16.gmra.mxu0 %v263
    %v367 = vpop.f32.mrf.mxu0
    %v368 = vadd.f32 %v284, %v367
    %v369 = vpop.f32.mrf.mxu0
    %v370 = vpop.f32.mrf.mxu0
    %v371 = vpop.f32.mrf.mxu0
    %372 = vdwg.mxu0
    %v373 = vmax.f32 %v368, 0.0
    %374 = vst [vmem:[#allocation8] sm:$0xff] %v373
    // Predicated region
    $region26: #{subnet_forward.1} parent=1 // pred_check
      _
    $region27: #{subnet_forward.1} parent=1 // pred_check_branch
      %376 = sbr.rel (0) target = $region29
    $region28: #{subnet_forward.1} parent=1 // pred_region
      %s378 = ssub.s32 128, 128
      %379 = vsyncadd [#allocation4], %s378
      %s381 = sshll.u32 [#allocation8], 4
      %s382 = int_to_ptr.vmem [resolvable:$true] %s381
      %384 = dma.vmem_to_hbm [thread:$0]  %s382, 128, %s3, [#allocation4]
    $region29: #{subnet_forward.1} parent=1 // pred_fallthru
      _
    // Predicated region
    $region30: #{subnet_forward.1} parent=1 // pred_check
      _
    $region31: #{subnet_forward.1} parent=1 // pred_check_branch
      %386 = sbr.rel (0) target = $region33
    $region32: #{subnet_forward.1} parent=1 // pred_region
      %387 = dma.done [#allocation4], 128
    $region33: #{subnet_forward.1} parent=1 // pred_fallthru
      _
    %388 = vsyncpa [#allocation3], 1
    %389 = vsyncpa [#allocation6], 1
    %390 = vsyncpa [#allocation4], 1

</llo_original>
